<compile_context>
chip_gen: v7x
topology: tpu7x:2x2x1
jax: 0.10.0
libtpu: 0.0.40
codegen_flags: <defaults>
</compile_context>

<pallas_src>
import functools

import jax
import jax.numpy as jnp
from jax.experimental import pallas as pl
from jax.experimental.pallas import tpu as pltpu


def _patchtst_kernel(x_ref, w_ref, b_ref, o_ref):
    # x_ref: (TM, CK)    bf16 flattened patches (k*C + c order)
    # w_ref: (CK, Npad)  bf16 flattened conv weight (resident across M tiles)
    # b_ref: (1, Npad)   f32 bias (resident)
    # o_ref: (TM, Npad)  output tile
    y = jnp.dot(x_ref[...], w_ref[...], preferred_element_type=jnp.float32)
    y = y + b_ref[...]
    o_ref[...] = jnp.maximum(y, 0.0).astype(o_ref.dtype)


def _round_up(a, b):
    return ((a + b - 1) // b) * b


@functools.partial(jax.jit, static_argnames=("patch_len", "stride", "tm"))
def patchtst_forward(x, weight, bias, *, patch_len=8, stride=8, tm=512):
    """x: (B, L, C); weight: (C_out, C_in, K); bias: (C_out,).  Returns (B, P, C_out)."""
    assert stride == patch_len, "kernel assumes non-overlapping patches (stride == patch_len)"
    B, L, C_in = x.shape
    C_out, C_in_w, K = weight.shape
    assert C_in_w == C_in and K == patch_len
    P = (L - patch_len) // stride + 1
    out_dtype = x.dtype
    compute_dtype = jnp.bfloat16

    # --- flatten patches in natural memory order (free view, no HBM pass) ----
    # x_flat[b*P + p, k*C + c] = x[b, p*K + k, c]
    x_trim = x[:, : P * patch_len, :]
    x_flat = x_trim.reshape(B * P, patch_len * C_in)

    # Transpose the tiny weight instead: w_flat[k*C + c, o] = weight[o, c, k]
    w_flat = jnp.transpose(weight, (2, 1, 0)).reshape(patch_len * C_in, C_out)

    M, CK = x_flat.shape
    N = C_out

    # --- padding for lane-dense (N -> 128k) and sublane-clean (M -> 8k) tiles -
    N_pad = _round_up(max(N, 128), 128)
    TM = max(8, min(_round_up(M, 8), _round_up(tm, 8)))
    M_pad = _round_up(M, TM)

    x_c = x_flat.astype(compute_dtype)
    if M_pad != M:
        x_c = jnp.pad(x_c, ((0, M_pad - M), (0, 0)))
    w_c = w_flat.astype(compute_dtype)
    b_c = bias.astype(jnp.float32).reshape(1, N)
    if N_pad != N:
        w_c = jnp.pad(w_c, ((0, 0), (0, N_pad - N)))
        b_c = jnp.pad(b_c, ((0, 0), (0, N_pad - N)))

    grid = (M_pad // TM,)

    # --- VMEM budget: double-buffered x/out tiles + resident weight/bias -----
    itemsize_c = jnp.dtype(compute_dtype).itemsize
    itemsize_o = jnp.dtype(out_dtype).itemsize
    vmem_bytes = (
        2 * TM * CK * itemsize_c
        + 2 * TM * N_pad * itemsize_o
        + 2 * CK * N_pad * itemsize_c
        + 2 * N_pad * 4
    )
    vmem_limit = min(max(2 * vmem_bytes + (1 << 20), 32 * 1024 * 1024), 64 * 1024 * 1024)

    cost = pl.CostEstimate(
        flops=2 * M_pad * CK * N_pad,
        transcendentals=0,
        bytes_accessed=(
            M_pad * CK * itemsize_c + CK * N_pad * itemsize_c
            + M_pad * N_pad * itemsize_o + N_pad * 4
        ),
    )

    out_p = pl.pallas_call(
        _patchtst_kernel,
        out_shape=jax.ShapeDtypeStruct((M_pad, N_pad), out_dtype),
        grid=grid,
        in_specs=[
            pl.BlockSpec((TM, CK), lambda i: (i, 0)),        # streamed M tiles
            pl.BlockSpec((CK, N_pad), lambda i: (0, 0)),     # resident weight
            pl.BlockSpec((1, N_pad), lambda i: (0, 0)),      # resident bias
        ],
        out_specs=pl.BlockSpec((TM, N_pad), lambda i: (i, 0)),
        compiler_params=pltpu.CompilerParams(
            dimension_semantics=("parallel",),
            vmem_limit_bytes=int(vmem_limit),
        ),
        cost_estimate=cost,
    )(x_c, w_c, b_c)

    return out_p[:M, :N].reshape(B, P, C_out)


def _reference(x, weight, bias, patch_len=8, stride=8, compute_dtype=jnp.bfloat16):
    """Pure-JAX reference matching nn.Conv1d(stride=kernel) + ReLU + permutes,
    with the same bf16 input quantization / f32 accumulation as the kernel."""
    B, L, C_in = x.shape
    C_out, _, K = weight.shape
    P = (L - patch_len) // stride + 1
    x_trim = x[:, : P * patch_len, :].reshape(B, P, K, C_in)
    xq = x_trim.astype(compute_dtype).astype(jnp.float32)
    wq = weight.astype(compute_dtype).astype(jnp.float32)
    y = jnp.einsum("bpkc,ock->bpo", xq, wq) + bias[None, None, :].astype(jnp.float32)
    return jnp.maximum(y, 0.0).astype(x.dtype)


if __name__ == "__main__":
    # Small shapes consistent with the module: input_dim (channels) = 16,
    # seq_len = 32, patch_len = stride = 8  ->  output (B, 4, 16).
    B, L, C = 2, 32, 16
    patch_len = stride = 8

    key = jax.random.PRNGKey(0)
    kx, kw, kb = jax.random.split(key, 3)
    x = jax.random.normal(kx, (B, L, C), dtype=jnp.float32)

    # Deterministic synthetic Conv1d parameters (shape from nn.Conv1d(C, C, 8, 8)).
    fan_in = C * patch_len
    bound = 1.0 / (fan_in ** 0.5)
    weight = jax.random.uniform(kw, (C, C, patch_len), jnp.float32, -bound, bound)
    bias = jax.random.uniform(kb, (C,), jnp.float32, -bound, bound)

    out = patchtst_forward(x, weight, bias, patch_len=patch_len, stride=stride)
    out = jax.block_until_ready(out)

    ref = _reference(x, weight, bias, patch_len, stride)
    assert out.shape == (B, (L - patch_len) // stride + 1, C)
    assert jnp.allclose(out, ref, atol=2e-3, rtol=2e-3), "mismatch vs reference"

    print("KERNEL_OK")
</pallas_src>

<mosaic_0001>
module attributes {stable_mosaic.version = 11 : i64} {
  func.func @_patchtst_kernel(%arg0: i32, %arg1: memref<8x128xbf16, #tpu.memory_space<vmem>>, %arg2: memref<128x128xbf16, #tpu.memory_space<vmem>>, %arg3: memref<1x128xf32, #tpu.memory_space<vmem>>, %arg4: memref<8x128xf32, #tpu.memory_space<vmem>>) attributes {dimension_semantics = [#tpu.dimension_semantics<parallel>], iteration_bounds = array<i64: 1>, scalar_prefetch = 0 : i64, scratch_operands = 0 : i64, tpu.core_type = #tpu.core_type<tc>, window_params = [{transform_indices = @transform_0, window_bounds = array<i64: 8, 128>}, {pipeline_mode = #tpu.pipeline_mode<synchronous>, transform_indices = @transform_1, window_bounds = array<i64: 128, 128>}, {pipeline_mode = #tpu.pipeline_mode<synchronous>, transform_indices = @transform_2, window_bounds = array<i64: 1, 128>}, {transform_indices = @transform_3, window_bounds = array<i64: 8, 128>}]} {
    %c0 = arith.constant 0 : index
    %c0_0 = arith.constant 0 : index
    %0 = vector.load %arg1[%c0, %c0_0] : memref<8x128xbf16, #tpu.memory_space<vmem>>, vector<8x128xbf16>
    %c0_1 = arith.constant 0 : index
    %c0_2 = arith.constant 0 : index
    %1 = vector.load %arg2[%c0_1, %c0_2] : memref<128x128xbf16, #tpu.memory_space<vmem>>, vector<128x128xbf16>
    %cst = arith.constant dense<0.000000e+00> : vector<8x128xf32>
    %2 = tpu.matmul %0, %1, %cst {dimension_numbers = #tpu.dot_dimension_numbers<[1], [0], [0], [1], [0, 0, 1, 1], [], []>} : vector<8x128xbf16>, vector<128x128xbf16>, vector<8x128xf32> -> vector<8x128xf32>
    %c0_3 = arith.constant 0 : index
    %c0_4 = arith.constant 0 : index
    %3 = vector.load %arg3[%c0_3, %c0_4] : memref<1x128xf32, #tpu.memory_space<vmem>>, vector<1x128xf32>
    %4 = vector.broadcast %3 : vector<1x128xf32> to vector<8x128xf32>
    %5 = arith.addf %2, %4 : vector<8x128xf32>
    %cst_5 = arith.constant 0.000000e+00 : f32
    %6 = vector.broadcast %cst_5 : f32 to vector<8x128xf32>
    %7 = arith.maximumf %5, %6 : vector<8x128xf32>
    %c0_6 = arith.constant 0 : index
    %c0_7 = arith.constant 0 : index
    %8 = vector.load %arg4[%c0_6, %c0_7] : memref<8x128xf32, #tpu.memory_space<vmem>>, vector<8x128xf32>
    tpu.vector_store %arg4[%c0_6, %c0_7], %7 {strides = array<i32>} : memref<8x128xf32, #tpu.memory_space<vmem>>, vector<8x128xf32>,
    return
  }
  func.func @transform_0(%arg0: i32) -> (i32, i32) {
    %c0_i32 = arith.constant 0 : i32
    %c0_i32_0 = arith.constant 0 : i32
    return %arg0, %c0_i32 : i32, i32
  }
  func.func @transform_1(%arg0: i32) -> (i32, i32) {
    %c0_i32 = arith.constant 0 : i32
    %c0_i32_0 = arith.constant 0 : i32
    %c0_i32_1 = arith.constant 0 : i32
    return %c0_i32, %c0_i32_0 : i32, i32
  }
  func.func @transform_2(%arg0: i32) -> (i32, i32) {
    %c0_i32 = arith.constant 0 : i32
    %c0_i32_0 = arith.constant 0 : i32
    %c0_i32_1 = arith.constant 0 : i32
    return %c0_i32, %c0_i32_0 : i32, i32
  }
  func.func @transform_3(%arg0: i32) -> (i32, i32) {
    %c0_i32 = arith.constant 0 : i32
    %c0_i32_0 = arith.constant 0 : i32
    return %arg0, %c0_i32 : i32, i32
  }
}

</mosaic_0001>

<llo_original>
// kernel: patchtst_forward.1
$region0: #{patchtst_forward.1}
  #allocation0 [shape = 'u32[]', space=smem, size = 0x4, offset = 0x4, fixed_abs, tag = 'smem constant byte address 0x4 - core index']
  #allocation1 [shape = 'u32[144,128]{1,0:T(1,128)}', space=vmem, size = 0x12000, scoped, tag = 'internal scratch']
  %s0 = inlined_call_operand.vmem [shape: bf16[8,128], index: 0, kind: input, shape index: {}]
  %s1 = inlined_call_operand.vmem [shape: bf16[128,128], index: 1, kind: input, shape index: {}]
  %s2 = inlined_call_operand.vmem [shape: f32[1,128], index: 2, kind: input, shape index: {}]
  %s3 = inlined_call_operand.hbm [shape: f32[8,128], index: 3, kind: output, shape index: {}]
  %s4 = sld [smem:[#allocation0]]
  $region22: #{patchtst_forward.1} parent=0
    _
  %s6 = ssub.s32 1, %s4
  %s7 = scalar_select 0, %s6, %s4
  $region1: #{patchtst_forward.1} parent=0
    #allocation2 [shape = 'u8[4096]{0}', space=vmem, size = 0x1000, scoped, tag = 'output window, operand 0, single buffered']
    #allocation3 [shape = 's32[1]{0}', space=sflag, size = 0x4, scoped, tag = 'scoped memory for patchtst_forward.1']
    %8 = vsyncpa [#allocation3], 0
    // Predicated region
    $region2: #{patchtst_forward.1} parent=1 // pred_check
      _
    $region3: #{patchtst_forward.1} parent=1 // pred_check_branch
      %10 = sbr.rel (0) target = $region5
    $region4: #{patchtst_forward.1} parent=1 // pred_region
      _
    $region5: #{patchtst_forward.1} parent=1 // pred_fallthru
      _
    // Predicated region
    $region6: #{patchtst_forward.1} parent=1 // pred_check
      _
    $region7: #{patchtst_forward.1} parent=1 // pred_check_branch
      %12 = sbr.rel (0) target = $region9
    $region8: #{patchtst_forward.1} parent=1 // pred_region
      _
    $region9: #{patchtst_forward.1} parent=1 // pred_fallthru
      _
    // Predicated region
    $region10: #{patchtst_forward.1} parent=1 // pred_check
      _
    $region11: #{patchtst_forward.1} parent=1 // pred_check_branch
      %14 = sbr.rel (0) target = $region13
    $region12: #{patchtst_forward.1} parent=1 // pred_region
      _
    $region13: #{patchtst_forward.1} parent=1 // pred_fallthru
      _
    %v16 = vld [vmem:[%s0] sm:$0xf]
    %v17 = vld [vmem:[%s1] sm:$0xf]
    %v18 = vld [vmem:[%s1 + $0x4] sm:$0xf]
    %v19 = vld [vmem:[%s1 + $0x8] sm:$0xf]
    %v20 = vld [vmem:[%s1 + $0xc] sm:$0xf]
    %v21 = vld [vmem:[%s1 + $0x10] sm:$0xf]
    %v22 = vld [vmem:[%s1 + $0x14] sm:$0xf]
    %v23 = vld [vmem:[%s1 + $0x18] sm:$0xf]
    %v24 = vld [vmem:[%s1 + $0x1c] sm:$0xf]
    %v25 = vld [vmem:[%s1 + $0x20] sm:$0xf]
    %v26 = vld [vmem:[%s1 + $0x24] sm:$0xf]
    %v27 = vld [vmem:[%s1 + $0x28] sm:$0xf]
    %v28 = vld [vmem:[%s1 + $0x2c] sm:$0xf]
    %v29 = vld [vmem:[%s1 + $0x30] sm:$0xf]
    %v30 = vld [vmem:[%s1 + $0x34] sm:$0xf]
    %v31 = vld [vmem:[%s1 + $0x38] sm:$0xf]
    %v32 = vld [vmem:[%s1 + $0x3c] sm:$0xf]
    %v33 = vld [vmem:[%s2] sm:$0x1]
    %v35 = vlaneseq
    %v36 = vshrl.u32 %v35, 7
    %v37 = vsub.s32 0, %v36
    %v38 = vrot.slane %v33, %v37
    %v56 = vunpack.c.l.b16 %v17
    %v57 = vunpack.c.l.b16 %v18
    %v58 = vunpack.c.l.b16 %v19
    %v59 = vunpack.c.l.b16 %v20
    %v60 = vunpack.c.l.b16 %v21
    %v61 = vunpack.c.l.b16 %v22
    %v62 = vunpack.c.l.b16 %v23
    %v63 = vunpack.c.l.b16 %v24
    %v64 = vunpack.c.l.b16 %v25
    %v65 = vunpack.c.l.b16 %v26
    %v66 = vunpack.c.l.b16 %v27
    %v67 = vunpack.c.l.b16 %v28
    %v68 = vunpack.c.l.b16 %v29
    %v69 = vunpack.c.l.b16 %v30
    %v70 = vunpack.c.l.b16 %v31
    %v71 = vunpack.c.l.b16 %v32
    %v72 = vpack.c.b16 %v57, %v56
    %v73 = vpack.c.b16 %v59, %v58
    %v74 = vpack.c.b16 %v61, %v60
    %v75 = vpack.c.b16 %v63, %v62
    %v76 = vpack.c.b16 %v65, %v64
    %v77 = vpack.c.b16 %v67, %v66
    %v78 = vpack.c.b16 %v69, %v68
    %v79 = vpack.c.b16 %v71, %v70
    %88 = vmatprep.subr.bf16.mxu0 0
    %89 = vmatpush1.bf16.msra.mxu0 %v72
    %90 = vmatprep.subr.bf16.mxu0 0
    %91 = vmatpush1.bf16.msra.mxu0 %v73
    %92 = vmatprep.subr.bf16.mxu0 0
    %93 = vmatpush1.bf16.msra.mxu0 %v74
    %94 = vmatprep.subr.bf16.mxu0 0
    %95 = vmatpush1.bf16.msra.mxu0 %v75
    %96 = vmatprep.subr.bf16.mxu0 0
    %97 = vmatpush1.bf16.msra.mxu0 %v76
    %98 = vmatprep.subr.bf16.mxu0 0
    %99 = vmatpush1.bf16.msra.mxu0 %v77
    %100 = vmatprep.subr.bf16.mxu0 0
    %101 = vmatpush1.bf16.msra.mxu0 %v78
    %102 = vmatprep.subr.bf16.mxu0 0
    %103 = vmatpush1.bf16.msra.mxu0 %v79
    %104 = vmatprep.subr.bf16.mxu0 0
    %105 = vmatpush1.bf16.msra.mxu0 0
    %106 = vmatprep.subr.bf16.mxu0 0
    %107 = vmatpush1.bf16.msra.mxu0 0
    %108 = vmatprep.subr.bf16.mxu0 0
    %109 = vmatpush1.bf16.msra.mxu0 0
    %110 = vmatprep.subr.bf16.mxu0 0
    %111 = vmatpush1.bf16.msra.mxu0 0
    %112 = vmatprep.subr.bf16.mxu0 0
    %113 = vmatpush1.bf16.msra.mxu0 0
    %114 = vmatprep.subr.bf16.mxu0 0
    %115 = vmatpush1.bf16.msra.mxu0 0
    %116 = vmatprep.subr.bf16.mxu0 0
    %117 = vmatpush1.bf16.msra.mxu0 0
    %118 = vmatprep.subr.bf16.mxu0 0
    %119 = vmatpush1.bf16.msra.mxu0 0
    %120 = vmatprep.mubr.bf16.mxu0 0
    %121 = vmatmul.mubr.bf16.gmra.mrb[0].mxu0 %v16
    %v122 = vpop.f32.mrb[0].mxu0
    %v123 = vadd.f32 %v38, %v122
    %v124 = vpop.f32.mrb[0].mxu0
    %v125 = vpop.f32.mrb[0].mxu0
    %v126 = vpop.f32.mrb[0].mxu0
    %127 = vdwg.mxu0
    %v128 = vmax.f32 %v123, 0.0
    %129 = vst [vmem:[#allocation2] sm:$0xff] %v128
    // Predicated region
    $region14: #{patchtst_forward.1} parent=1 // pred_check
      _
    $region15: #{patchtst_forward.1} parent=1 // pred_check_branch
      %131 = sbr.rel (0) target = $region17
    $region16: #{patchtst_forward.1} parent=1 // pred_region
      %s133 = ssub.s32 128, 128
      %134 = vsyncadd [#allocation3], %s133
      %s136 = sshll.u32 [#allocation2], 4
      %s137 = int_to_ptr.vmem [resolvable:$true] %s136
      %139 = dma.vmem_to_hbm [thread:$0]  %s137, 128, %s3, [#allocation3]
    $region17: #{patchtst_forward.1} parent=1 // pred_fallthru
      _
    // Predicated region
    $region18: #{patchtst_forward.1} parent=1 // pred_check
      _
    $region19: #{patchtst_forward.1} parent=1 // pred_check_branch
      %141 = sbr.rel (0) target = $region21
    $region20: #{patchtst_forward.1} parent=1 // pred_region
      %142 = dma.done [#allocation3], 128
    $region21: #{patchtst_forward.1} parent=1 // pred_fallthru
      _
    %143 = vsyncpa [#allocation3], 1

</llo_original>
